<compile_context>
chip_gen: v7x
topology: tpu7x:2x2x1
jax: 0.10.0
libtpu: 0.0.40
codegen_flags: <defaults>
</compile_context>

<pallas_src>
import functools
import math

import jax
import jax.numpy as jnp
from jax.experimental import pallas as pl
from jax.experimental.pallas import tpu as pltpu

LN_EPS = 1e-5


def _round_up(x, m):
    return (x + m - 1) // m * m


def _embed_ln_kernel(p_ref, w_ref, b_ref, g_ref, beta_ref, o_ref, *, e_true):
    # p_ref: [TM, K] bf16   w_ref: [K, Ep] bf16   b/g/beta: [1, Ep] f32
    # o_ref: [TM, Ep] (bf16 by default)
    x = jnp.dot(p_ref[...], w_ref[...], preferred_element_type=jnp.float32)
    x = x + b_ref[...]
    # Padded embed columns (>= e_true) are exactly zero (zero weight cols, zero
    # bias), so plain row sums with a 1/e_true scale give the exact mean/var.
    inv_e = jnp.float32(1.0 / e_true)
    s1 = jnp.sum(x, axis=-1, keepdims=True)
    s2 = jnp.sum(x * x, axis=-1, keepdims=True)
    mu = s1 * inv_e
    var = jnp.maximum(s2 * inv_e - mu * mu, 0.0)   # guard tiny negative fp error
    y = (x - mu) * jax.lax.rsqrt(var + LN_EPS)
    o_ref[...] = (y * g_ref[...] + beta_ref[...]).astype(o_ref.dtype)


def _im2col_nhwc(x_nchw, kh, kw, stride, pad):
    """[B,C,H,W] -> ([B*Ho*Wo, kh*kw*C], Ho, Wo), K ordered (kh, kw, Cin).

    One small NCHW->NHWC transpose of the *input*; the big [M, K] tensor is
    produced directly in its final layout (no 6-D transpose over M*K).
    """
    B, C, H, W = x_nchw.shape
    x = jnp.transpose(x_nchw, (0, 2, 3, 1))                         # NHWC, small copy
    xp = jnp.pad(x, ((0, 0), (pad, pad), (pad, pad), (0, 0)))
    Hout = (H + 2 * pad - kh) // stride + 1
    Wout = (W + 2 * pad - kw) // stride + 1
    taps = []
    for di in range(kh):
        for dj in range(kw):
            taps.append(xp[:, di:di + stride * Hout:stride,
                           dj:dj + stride * Wout:stride, :])         # [B, Ho, Wo, C]
    pat = jnp.stack(taps, axis=3)                                    # [B, Ho, Wo, kh*kw, C]
    return pat.reshape(B * Hout * Wout, kh * kw * C), Hout, Wout


def overlap_patch_embed(x_nchw, conv_w, conv_b, ln_g, ln_b, *, stride,
                        compute_dtype=jnp.bfloat16, out_dtype=jnp.bfloat16,
                        tm=1024, patch_buffering=2):
    """x_nchw: [B, Cin, H, W]; conv_w: [E, Cin, kh, kw]; returns ([B, N, E], Hout, Wout)."""
    E, Cin, kh, kw = conv_w.shape
    B = x_nchw.shape[0]
    pad = kh // 2

    # bf16 operands: halves the materialized patch-matrix HBM bytes and hits the
    # native MXU bf16 path; accumulation stays f32 inside the kernel.
    xc = x_nchw.astype(compute_dtype)
    wc = conv_w.astype(compute_dtype)

    patches, Hout, Wout = _im2col_nhwc(xc, kh, kw, stride, pad)      # [M, K] bf16
    M, K = patches.shape

    # Lane-dense output stores want a 128-multiple embed width; skip the padding
    # (and the post-kernel slice) entirely when embed_dim is already aligned.
    Ep = E if E % 128 == 0 else _round_up(E, 128)

    # Row tile: big enough to amortize the ~0.35us/step pipeline overhead; multiple
    # of 256 (v6e/v7x MXU) and 128 (v5e).  Shrink only to keep >= 4 grid tiles so
    # both v7x TensorCores get work on the single "parallel" grid axis.
    TM = min(tm, _round_up(M, 8))
    while TM > 256 and pl.cdiv(M, TM) < 4:
        TM //= 2

    # Weight reordered (tiny) to match the (kh, kw, Cin) patch K-order.
    w2d = wc.transpose(2, 3, 1, 0).reshape(K, E)
    if Ep != E:
        w2d = jnp.pad(w2d, ((0, 0), (0, Ep - E)))

    def _vec(v):
        v = v.astype(jnp.float32).reshape(1, E)
        return jnp.pad(v, ((0, 0), (0, Ep - E))) if Ep != E else v

    b2d, g2d, beta2d = _vec(conv_b), _vec(ln_g), _vec(ln_b)

    # Single dominant input stream; optional deeper buffering if DMA is exposed
    # after the larger tile (review: v6e suggestion).  Default 2 = standard.
    if patch_buffering > 2:
        patch_spec = pl.BlockSpec((TM, K), lambda i: (i, 0),
                                  pipeline_mode=pl.Buffered(patch_buffering))
    else:
        patch_spec = pl.BlockSpec((TM, K), lambda i: (i, 0))

    out = pl.pallas_call(
        functools.partial(_embed_ln_kernel, e_true=E),
        out_shape=jax.ShapeDtypeStruct((M, Ep), out_dtype),
        grid_spec=pltpu.PrefetchScalarGridSpec(
            num_scalar_prefetch=0,
            grid=(pl.cdiv(M, TM),),            # ragged last block; OOB writes dropped
            in_specs=[
                patch_spec,                                  # streamed patch tiles
                pl.BlockSpec((K, Ep), lambda i: (0, 0)),     # weight, resident
                pl.BlockSpec((1, Ep), lambda i: (0, 0)),     # conv bias
                pl.BlockSpec((1, Ep), lambda i: (0, 0)),     # LN gamma
                pl.BlockSpec((1, Ep), lambda i: (0, 0)),     # LN beta
            ],
            out_specs=pl.BlockSpec((TM, Ep), lambda i: (i, 0)),
        ),
        compiler_params=pltpu.CompilerParams(
            dimension_semantics=("parallel",)),              # megacore split of M tiles
    )(patches, w2d, b2d, g2d, beta2d)

    if Ep != E:
        out = out[:, :E]
    return out.reshape(B, Hout * Wout, E), Hout, Wout


if __name__ == "__main__":
    # Small shapes consistent with the module: B=2, Cin=4, 16x16 image,
    # patch_size=7, stride=4, embed_dim=32  ->  Hout=Wout=4, N=16 patches.
    B, Cin, H, W = 2, 4, 16, 16
    patch_size, stride, embed_dim = 7, 4, 32

    key = jax.random.PRNGKey(0)
    kx, kw_, kb, kg, kbeta = jax.random.split(key, 5)
    x = jax.random.normal(kx, (B, Cin, H, W), dtype=jnp.float32)
    fan_out = patch_size * patch_size * embed_dim
    conv_w = math.sqrt(2.0 / fan_out) * jax.random.normal(
        kw_, (embed_dim, Cin, patch_size, patch_size), dtype=jnp.float32)
    conv_b = 0.1 * jax.random.normal(kb, (embed_dim,), dtype=jnp.float32)
    ln_g = 1.0 + 0.1 * jax.random.normal(kg, (embed_dim,), dtype=jnp.float32)
    ln_b = 0.1 * jax.random.normal(kbeta, (embed_dim,), dtype=jnp.float32)

    out, Hout, Wout = overlap_patch_embed(x, conv_w, conv_b, ln_g, ln_b, stride=stride)
    out = jax.block_until_ready(out)

    # Pure-JAX reference (operands rounded to bf16 like the kernel, f32 math).
    pad = patch_size // 2
    xr = x.astype(jnp.bfloat16).astype(jnp.float32)
    wr = conv_w.astype(jnp.bfloat16).astype(jnp.float32)
    ref_conv = jax.lax.conv_general_dilated(
        xr, wr, window_strides=(stride, stride), padding=[(pad, pad)] * 2,
        dimension_numbers=("NCHW", "OIHW", "NCHW"),
        precision=jax.lax.Precision.HIGHEST) + conv_b[None, :, None, None]
    ref = ref_conv.reshape(B, embed_dim, -1).transpose(0, 2, 1)
    mu = ref.mean(-1, keepdims=True)
    var = ((ref - mu) ** 2).mean(-1, keepdims=True)
    ref = (ref - mu) / jnp.sqrt(var + LN_EPS) * ln_g + ln_b

    assert out.shape == (B, Hout * Wout, embed_dim)
    assert Hout == (H + 2 * pad - patch_size) // stride + 1
    err = float(jnp.max(jnp.abs(out.astype(jnp.float32) - ref)))
    # Tolerance dominated by the bf16 output cast; LN math is f32 in-kernel.
    assert jnp.allclose(out.astype(jnp.float32), ref, atol=1.5e-2, rtol=2e-2), err
    print("KERNEL_OK")
</pallas_src>

<mosaic_0001>
module attributes {stable_mosaic.version = 11 : i64} {
  func.func @_embed_ln_kernel(%arg0: i32, %arg1: memref<32x196xbf16, #tpu.memory_space<vmem>>, %arg2: memref<196x128xbf16, #tpu.memory_space<vmem>>, %arg3: memref<1x128xf32, #tpu.memory_space<vmem>>, %arg4: memref<1x128xf32, #tpu.memory_space<vmem>>, %arg5: memref<1x128xf32, #tpu.memory_space<vmem>>, %arg6: memref<32x128xbf16, #tpu.memory_space<vmem>>) attributes {dimension_semantics = [#tpu.dimension_semantics<parallel>], iteration_bounds = array<i64: 1>, scalar_prefetch = 0 : i64, scratch_operands = 0 : i64, tpu.core_type = #tpu.core_type<tc>, window_params = [{transform_indices = @transform_0, window_bounds = array<i64: 32, 196>}, {pipeline_mode = #tpu.pipeline_mode<synchronous>, transform_indices = @transform_1, window_bounds = array<i64: 196, 128>}, {pipeline_mode = #tpu.pipeline_mode<synchronous>, transform_indices = @transform_2, window_bounds = array<i64: 1, 128>}, {pipeline_mode = #tpu.pipeline_mode<synchronous>, transform_indices = @transform_3, window_bounds = array<i64: 1, 128>}, {pipeline_mode = #tpu.pipeline_mode<synchronous>, transform_indices = @transform_4, window_bounds = array<i64: 1, 128>}, {transform_indices = @transform_5, window_bounds = array<i64: 32, 128>}]} {
    %c0 = arith.constant 0 : index
    %c0_0 = arith.constant 0 : index
    %0 = vector.load %arg1[%c0, %c0_0] : memref<32x196xbf16, #tpu.memory_space<vmem>>, vector<32x196xbf16>
    %c0_1 = arith.constant 0 : index
    %c0_2 = arith.constant 0 : index
    %1 = vector.load %arg2[%c0_1, %c0_2] : memref<196x128xbf16, #tpu.memory_space<vmem>>, vector<196x128xbf16>
    %cst = arith.constant dense<0.000000e+00> : vector<32x128xf32>
    %2 = tpu.matmul %0, %1, %cst {dimension_numbers = #tpu.dot_dimension_numbers<[1], [0], [0], [1], [0, 0, 1, 1], [], []>} : vector<32x196xbf16>, vector<196x128xbf16>, vector<32x128xf32> -> vector<32x128xf32>
    %c0_3 = arith.constant 0 : index
    %c0_4 = arith.constant 0 : index
    %3 = vector.load %arg3[%c0_3, %c0_4] : memref<1x128xf32, #tpu.memory_space<vmem>>, vector<1x128xf32>
    %4 = vector.broadcast %3 : vector<1x128xf32> to vector<32x128xf32>
    %5 = arith.addf %2, %4 : vector<32x128xf32>
    %cst_5 = arith.constant dense<0.000000e+00> : vector<32xf32>
    %6 = vector.multi_reduction <add>, %5, %cst_5 [1] : vector<32x128xf32> to vector<32xf32>
    %7 = vector.shape_cast %6 : vector<32xf32> to vector<32x1xf32>
    %8 = arith.mulf %5, %5 : vector<32x128xf32>
    %cst_6 = arith.constant dense<0.000000e+00> : vector<32xf32>
    %9 = vector.multi_reduction <add>, %8, %cst_6 [1] : vector<32x128xf32> to vector<32xf32>
    %10 = vector.shape_cast %9 : vector<32xf32> to vector<32x1xf32>
    %cst_7 = arith.constant 3.125000e-02 : f32
    %11 = vector.broadcast %cst_7 : f32 to vector<32x1xf32>
    %12 = arith.mulf %7, %11 : vector<32x1xf32>
    %cst_8 = arith.constant 3.125000e-02 : f32
    %13 = vector.broadcast %cst_8 : f32 to vector<32x1xf32>
    %14 = arith.mulf %10, %13 : vector<32x1xf32>
    %15 = arith.mulf %12, %12 : vector<32x1xf32>
    %16 = arith.subf %14, %15 : vector<32x1xf32>
    %cst_9 = arith.constant 0.000000e+00 : f32
    %17 = vector.broadcast %cst_9 : f32 to vector<32x1xf32>
    %18 = arith.maximumf %16, %17 : vector<32x1xf32>
    %19 = vector.broadcast %12 : vector<32x1xf32> to vector<32x128xf32>
    %20 = arith.subf %5, %19 : vector<32x128xf32>
    %cst_10 = arith.constant 9.99999974E-6 : f32
    %21 = vector.broadcast %cst_10 : f32 to vector<32x1xf32>
    %22 = arith.addf %18, %21 : vector<32x1xf32>
    %23 = math.rsqrt %22 : vector<32x1xf32>
    %24 = vector.broadcast %23 : vector<32x1xf32> to vector<32x128xf32>
    %25 = arith.mulf %20, %24 : vector<32x128xf32>
    %c0_11 = arith.constant 0 : index
    %c0_12 = arith.constant 0 : index
    %26 = vector.load %arg4[%c0_11, %c0_12] : memref<1x128xf32, #tpu.memory_space<vmem>>, vector<1x128xf32>
    %27 = vector.broadcast %26 : vector<1x128xf32> to vector<32x128xf32>
    %28 = arith.mulf %25, %27 : vector<32x128xf32>
    %c0_13 = arith.constant 0 : index
    %c0_14 = arith.constant 0 : index
    %29 = vector.load %arg5[%c0_13, %c0_14] : memref<1x128xf32, #tpu.memory_space<vmem>>, vector<1x128xf32>
    %30 = vector.broadcast %29 : vector<1x128xf32> to vector<32x128xf32>
    %31 = arith.addf %28, %30 : vector<32x128xf32>
    %32 = arith.truncf %31 : vector<32x128xf32> to vector<32x128xbf16>
    %c0_15 = arith.constant 0 : index
    %c0_16 = arith.constant 0 : index
    %33 = vector.load %arg6[%c0_15, %c0_16] : memref<32x128xbf16, #tpu.memory_space<vmem>>, vector<32x128xbf16>
    tpu.vector_store %arg6[%c0_15, %c0_16], %32 {strides = array<i32>} : memref<32x128xbf16, #tpu.memory_space<vmem>>, vector<32x128xbf16>,
    return
  }
  func.func @transform_0(%arg0: i32) -> (i32, i32) {
    %c0_i32 = arith.constant 0 : i32
    %c0_i32_0 = arith.constant 0 : i32
    return %arg0, %c0_i32 : i32, i32
  }
  func.func @transform_1(%arg0: i32) -> (i32, i32) {
    %c0_i32 = arith.constant 0 : i32
    %c0_i32_0 = arith.constant 0 : i32
    %c0_i32_1 = arith.constant 0 : i32
    return %c0_i32, %c0_i32_0 : i32, i32
  }
  func.func @transform_2(%arg0: i32) -> (i32, i32) {
    %c0_i32 = arith.constant 0 : i32
    %c0_i32_0 = arith.constant 0 : i32
    %c0_i32_1 = arith.constant 0 : i32
    return %c0_i32, %c0_i32_0 : i32, i32
  }
  func.func @transform_3(%arg0: i32) -> (i32, i32) {
    %c0_i32 = arith.constant 0 : i32
    %c0_i32_0 = arith.constant 0 : i32
    %c0_i32_1 = arith.constant 0 : i32
    return %c0_i32, %c0_i32_0 : i32, i32
  }
  func.func @transform_4(%arg0: i32) -> (i32, i32) {
    %c0_i32 = arith.constant 0 : i32
    %c0_i32_0 = arith.constant 0 : i32
    %c0_i32_1 = arith.constant 0 : i32
    return %c0_i32, %c0_i32_0 : i32, i32
  }
  func.func @transform_5(%arg0: i32) -> (i32, i32) {
    %c0_i32 = arith.constant 0 : i32
    %c0_i32_0 = arith.constant 0 : i32
    return %arg0, %c0_i32 : i32, i32
  }
}

</mosaic_0001>

<llo_original>
// kernel: tpu_custom_call.1
$region0: #{tpu_custom_call.1}
  #allocation0 [shape = 'u32[]', space=smem, size = 0x4, offset = 0x4, fixed_abs, tag = 'smem constant byte address 0x4 - core index']
  #allocation1 [shape = 'u32[144,128]{1,0:T(1,128)}', space=vmem, size = 0x12000, scoped, tag = 'internal scratch']
  %s0 = inlined_call_operand.hbm [shape: bf16[32,196], index: 0, kind: input, shape index: {}]
  %s1 = inlined_call_operand.hbm [shape: bf16[196,128], index: 1, kind: input, shape index: {}]
  %s2 = inlined_call_operand.vmem [shape: f32[1,128], index: 2, kind: input, shape index: {}]
  %s3 = inlined_call_operand.vmem [shape: f32[1,128], index: 3, kind: input, shape index: {}]
  %s4 = inlined_call_operand.vmem [shape: f32[1,128], index: 4, kind: input, shape index: {}]
  %s5 = inlined_call_operand.hbm [shape: bf16[32,128], index: 5, kind: output, shape index: {}]
  %s6 = sld [smem:[#allocation0]]
  $region38: #{tpu_custom_call.1} parent=0
    _
  %s8 = ssub.s32 1, %s6
  %s9 = scalar_select 0, %s8, %s6
  $region1: #{tpu_custom_call.1} parent=0
    #allocation2 [shape = 'u8[16384]{0}', space=vmem, size = 0x4000, scoped, tag = 'input window, operand 0, single buffered']
    #allocation3 [shape = 's32[1]{0}', space=sflag, size = 0x4, scoped, tag = 'scoped memory for tpu_custom_call.1']
    #allocation4 [shape = 's32[1]{0}', space=sflag, size = 0x4, scoped, tag = 'scoped memory for tpu_custom_call.1']
    #allocation5 [shape = 'u8[51200]{0}', space=vmem, size = 0xc800, scoped, tag = 'input window, operand 1, single buffered']
    #allocation6 [shape = 's32[1]{0}', space=sflag, size = 0x4, scoped, tag = 'scoped memory for tpu_custom_call.1']
    #allocation7 [shape = 'u8[8192]{0}', space=vmem, size = 0x2000, scoped, tag = 'output window, operand 0, single buffered']
    %10 = vsyncpa [#allocation3], 0
    %11 = vsyncpa [#allocation6], 0
    %12 = vsyncpa [#allocation4], 0
    // Predicated region
    $region2: #{tpu_custom_call.1} parent=1 // pred_check
      _
    $region3: #{tpu_custom_call.1} parent=1 // pred_check_branch
      %14 = sbr.rel (0) target = $region5
    $region4: #{tpu_custom_call.1} parent=1 // pred_region
      %s16 = ssub.s32 512, 512
      %17 = vsyncadd [#allocation3], %s16
      %s18 = sshll.u32 [#allocation2], 4
      %s19 = int_to_ptr.vmem [resolvable:$true] %s18
      %24 = dma.hbm_to_vmem [thread:$0]  %s0, 512, %s19, [#allocation3], 128, 128, 8
    $region5: #{tpu_custom_call.1} parent=1 // pred_fallthru
      _
    // Predicated region
    $region6: #{tpu_custom_call.1} parent=1 // pred_check
      _
    $region7: #{tpu_custom_call.1} parent=1 // pred_check_branch
      %26 = sbr.rel (0) target = $region9
    $region8: #{tpu_custom_call.1} parent=1 // pred_region
      %s28 = ssub.s32 1600, 1600
      %29 = vsyncadd [#allocation6], %s28
      %s30 = sshll.u32 [#allocation5], 4
      %s31 = int_to_ptr.vmem [resolvable:$true] %s30
      %36 = dma.hbm_to_vmem [thread:$0]  %s1, 1600, %s31, [#allocation6], 64, 64, 4
    $region9: #{tpu_custom_call.1} parent=1 // pred_fallthru
      _
    // Predicated region
    $region10: #{tpu_custom_call.1} parent=1 // pred_check
      _
    $region11: #{tpu_custom_call.1} parent=1 // pred_check_branch
      %38 = sbr.rel (0) target = $region13
    $region12: #{tpu_custom_call.1} parent=1 // pred_region
      _
    $region13: #{tpu_custom_call.1} parent=1 // pred_fallthru
      _
    // Predicated region
    $region14: #{tpu_custom_call.1} parent=1 // pred_check
      _
    $region15: #{tpu_custom_call.1} parent=1 // pred_check_branch
      %40 = sbr.rel (0) target = $region17
    $region16: #{tpu_custom_call.1} parent=1 // pred_region
      _
    $region17: #{tpu_custom_call.1} parent=1 // pred_fallthru
      _
    // Predicated region
    $region18: #{tpu_custom_call.1} parent=1 // pred_check
      _
    $region19: #{tpu_custom_call.1} parent=1 // pred_check_branch
      %42 = sbr.rel (0) target = $region21
    $region20: #{tpu_custom_call.1} parent=1 // pred_region
      _
    $region21: #{tpu_custom_call.1} parent=1 // pred_fallthru
      _
    // Predicated region
    $region22: #{tpu_custom_call.1} parent=1 // pred_check
      _
    $region23: #{tpu_custom_call.1} parent=1 // pred_check_branch
      %44 = sbr.rel (0) target = $region25
    $region24: #{tpu_custom_call.1} parent=1 // pred_region
      %45 = dma.done [#allocation3], 512
    $region25: #{tpu_custom_call.1} parent=1 // pred_fallthru
      _
    // Predicated region
    $region26: #{tpu_custom_call.1} parent=1 // pred_check
      _
    $region27: #{tpu_custom_call.1} parent=1 // pred_check_branch
      %47 = sbr.rel (0) target = $region29
    $region28: #{tpu_custom_call.1} parent=1 // pred_region
      %48 = dma.done [#allocation6], 1600
    $region29: #{tpu_custom_call.1} parent=1 // pred_fallthru
      _
    %v50 = vld [vmem:[#allocation2] sm:$0xff]
    %v51 = vld [vmem:[#allocation2 + $0x8] sm:$0xff]
    %v52 = vld [vmem:[#allocation2 + $0x10] sm:$0xff]
    %v53 = vld [vmem:[#allocation2 + $0x18] sm:$0xff]
    %v54 = vld [vmem:[#allocation5] sm:$0xf]
    %v55 = vld [vmem:[#allocation5 + $0x4] sm:$0xf]
    %v56 = vld [vmem:[#allocation5 + $0x8] sm:$0xf]
    %v57 = vld [vmem:[#allocation5 + $0xc] sm:$0xf]
    %v58 = vld [vmem:[#allocation5 + $0x10] sm:$0xf]
    %v59 = vld [vmem:[#allocation5 + $0x14] sm:$0xf]
    %v60 = vld [vmem:[#allocation5 + $0x18] sm:$0xf]
    %v61 = vld [vmem:[#allocation5 + $0x1c] sm:$0xf]
    %v62 = vld [vmem:[#allocation5 + $0x20] sm:$0xf]
    %v63 = vld [vmem:[#allocation5 + $0x24] sm:$0xf]
    %v64 = vld [vmem:[#allocation5 + $0x28] sm:$0xf]
    %v65 = vld [vmem:[#allocation5 + $0x2c] sm:$0xf]
    %v66 = vld [vmem:[#allocation5 + $0x30] sm:$0xf]
    %v67 = vld [vmem:[#allocation5 + $0x34] sm:$0xf]
    %v68 = vld [vmem:[#allocation5 + $0x38] sm:$0xf]
    %v69 = vld [vmem:[#allocation5 + $0x3c] sm:$0xf]
    %v70 = vld [vmem:[#allocation5 + $0x40] sm:$0xf]
    %v71 = vld [vmem:[#allocation5 + $0x44] sm:$0xf]
    %v72 = vld [vmem:[#allocation5 + $0x48] sm:$0xf]
    %v73 = vld [vmem:[#allocation5 + $0x4c] sm:$0xf]
    %v74 = vld [vmem:[#allocation5 + $0x50] sm:$0xf]
    %v75 = vld [vmem:[#allocation5 + $0x54] sm:$0xf]
    %v76 = vld [vmem:[#allocation5 + $0x58] sm:$0xf]
    %v77 = vld [vmem:[#allocation5 + $0x5c] sm:$0xf]
    %v78 = vld [vmem:[#allocation5 + $0x60] sm:$0x3]
    %v79 = vld [vmem:[%s2] sm:$0x1]
    %v81 = vlaneseq
    %v82 = vshrl.u32 %v81, 7
    %v83 = vsub.s32 0, %v82
    %v84 = vrot.slane %v79, %v83
    %v90 = vunpack.c.l.b16 %v50
    %v91 = vunpack.c.h.b16 %v50
    %v92 = vunpack.c.l.b16 %v51
    %v93 = vunpack.c.h.b16 %v51
    %v94 = vunpack.c.l.b16 %v52
    %v95 = vunpack.c.h.b16 %v52
    %v96 = vunpack.c.l.b16 %v53
    %v97 = vunpack.c.h.b16 %v53
    %v98 = vpack.c.b16 %v92, %v90
    %v99 = vpack.c.b16 %v93, %v91
    %v100 = vpack.c.b16 %v96, %v94
    %v101 = vpack.c.b16 %v97, %v95
    %v129 = vunpack.c.l.b16 %v54
    %v130 = vunpack.c.l.b16 %v55
    %v131 = vunpack.c.l.b16 %v56
    %v132 = vunpack.c.l.b16 %v57
    %v133 = vunpack.c.l.b16 %v58
    %v134 = vunpack.c.l.b16 %v59
    %v135 = vunpack.c.l.b16 %v60
    %v136 = vunpack.c.l.b16 %v61
    %v137 = vunpack.c.l.b16 %v62
    %v138 = vunpack.c.l.b16 %v63
    %v139 = vunpack.c.l.b16 %v64
    %v140 = vunpack.c.l.b16 %v65
    %v141 = vunpack.c.l.b16 %v66
    %v142 = vunpack.c.l.b16 %v67
    %v143 = vunpack.c.l.b16 %v68
    %v144 = vunpack.c.l.b16 %v69
    %v145 = vunpack.c.l.b16 %v70
    %v146 = vunpack.c.l.b16 %v71
    %v147 = vunpack.c.l.b16 %v72
    %v148 = vunpack.c.l.b16 %v73
    %v149 = vunpack.c.l.b16 %v74
    %v150 = vunpack.c.l.b16 %v75
    %v151 = vunpack.c.l.b16 %v76
    %v152 = vunpack.c.l.b16 %v77
    %v153 = vunpack.c.l.b16 %v78
    %v154 = vpack.c.b16 %v130, %v129
    %v155 = vpack.c.b16 %v132, %v131
    %v156 = vpack.c.b16 %v134, %v133
    %v157 = vpack.c.b16 %v136, %v135
    %v158 = vpack.c.b16 %v138, %v137
    %v159 = vpack.c.b16 %v140, %v139
    %v160 = vpack.c.b16 %v142, %v141
    %v161 = vpack.c.b16 %v144, %v143
    %v162 = vpack.c.b16 %v146, %v145
    %v163 = vpack.c.b16 %v148, %v147
    %v164 = vpack.c.b16 %v150, %v149
    %v165 = vpack.c.b16 %v152, %v151
    %v166 = vpack.c.b16 %v153, %v153
    %vm179 = vcmask 556032
    %v181 = vsel %vm179, %v99, 0
    %v184 = vsel %vm179, %v101, 0
    %vm186 = vcmask 1041408
    %v188 = vsel %vm186, %v166, 0
    %190 = vmatprep.subr.bf16.mxu0 0
    %191 = vmatpush1.bf16.msra.mxu0 %v154
    %192 = vmatprep.subr.bf16.mxu0 0
    %193 = vmatpush1.bf16.msra.mxu0 %v155
    %194 = vmatprep.subr.bf16.mxu0 0
    %195 = vmatpush1.bf16.msra.mxu0 %v156
    %196 = vmatprep.subr.bf16.mxu0 0
    %197 = vmatpush1.bf16.msra.mxu0 %v157
    %198 = vmatprep.subr.bf16.mxu0 0
    %199 = vmatpush1.bf16.msra.mxu0 %v158
    %200 = vmatprep.subr.bf16.mxu0 0
    %201 = vmatpush1.bf16.msra.mxu0 %v159
    %202 = vmatprep.subr.bf16.mxu0 0
    %203 = vmatpush1.bf16.msra.mxu0 %v160
    %204 = vmatprep.subr.bf16.mxu0 0
    %205 = vmatpush1.bf16.msra.mxu0 %v161
    %206 = vmatprep.subr.bf16.mxu0 0
    %207 = vmatpush1.bf16.msra.mxu0 %v162
    %208 = vmatprep.subr.bf16.mxu0 0
    %209 = vmatpush1.bf16.msra.mxu0 %v163
    %210 = vmatprep.subr.bf16.mxu0 0
    %211 = vmatpush1.bf16.msra.mxu0 %v164
    %212 = vmatprep.subr.bf16.mxu0 0
    %213 = vmatpush1.bf16.msra.mxu0 %v165
    %214 = vmatprep.subr.bf16.mxu0 0
    %215 = vmatpush1.bf16.msra.mxu0 %v188
    %216 = vmatprep.subr.bf16.mxu0 0
    %217 = vmatpush1.bf16.msra.mxu0 0
    %218 = vmatprep.subr.bf16.mxu0 0
    %219 = vmatpush1.bf16.msra.mxu0 0
    %220 = vmatprep.subr.bf16.mxu0 0
    %221 = vmatpush1.bf16.msra.mxu0 0
    %222 = vmatprep.mubr.bf16.mxu0 %v181
    %223 = vmatmul.mubr.bf16.gmra.mrb[0].mxu0 %v98
    %v224 = vpop.f32.mrb[0].mxu0
    %v225 = vadd.f32 %v84, %v224
    %v226 = vpop.f32.mrb[0].mxu0
    %v227 = vpop.f32.mrb[0].mxu0
    %v228 = vadd.f32 %v84, %v227
    %v229 = vpop.f32.mrb[0].mxu0
    %230 = vmatprep.mubr.bf16.mxu0 %v184
    %231 = vmatmul.mubr.bf16.gmra.mrb[0].mxu0 %v100
    %v232 = vpop.f32.mrb[0].mxu0
    %v233 = vadd.f32 %v84, %v232
    %v234 = vpop.f32.mrb[0].mxu0
    %v235 = vpop.f32.mrb[0].mxu0
    %v236 = vadd.f32 %v84, %v235
    %v237 = vpop.f32.mrb[0].mxu0
    %238 = vdwg.mxu0
    %239 = vadd.xlane.f32.xlu0 %v225
    %v240 = vpop.xlane.xlu0 %239
    %241 = vadd.xlane.f32.xlu0 %v228
    %v242 = vpop.xlane.xlu0 %241
    %243 = vadd.xlane.f32.xlu0 %v233
    %v244 = vpop.xlane.xlu0 %243
    %245 = vadd.xlane.f32.xlu0 %v236
    %v246 = vpop.xlane.xlu0 %245
    %v247 = vmul.f32 %v225, %v225
    %v248 = vmul.f32 %v228, %v228
    %v249 = vmul.f32 %v233, %v233
    %v250 = vmul.f32 %v236, %v236
    %251 = vadd.xlane.f32.xlu0 %v247
    %v252 = vpop.xlane.xlu0 %251
    %253 = vadd.xlane.f32.xlu0 %v248
    %v254 = vpop.xlane.xlu0 %253
    %255 = vadd.xlane.f32.xlu0 %v249
    %v256 = vpop.xlane.xlu0 %255
    %257 = vadd.xlane.f32.xlu0 %v250
    %v258 = vpop.xlane.xlu0 %257
    %v259 = vmul.f32 %v240, 0.03125
    %v260 = vmul.f32 %v242, 0.03125
    %v261 = vmul.f32 %v244, 0.03125
    %v262 = vmul.f32 %v246, 0.03125
    %v263 = vmul.f32 %v252, 0.03125
    %v264 = vmul.f32 %v254, 0.03125
    %v265 = vmul.f32 %v256, 0.03125
    %v266 = vmul.f32 %v258, 0.03125
    %v267 = vmul.f32 %v259, %v259
    %v268 = vmul.f32 %v260, %v260
    %v269 = vmul.f32 %v261, %v261
    %v270 = vmul.f32 %v262, %v262
    %v271 = vsub.f32 %v263, %v267
    %v272 = vsub.f32 %v264, %v268
    %v273 = vsub.f32 %v265, %v269
    %v274 = vsub.f32 %v266, %v270
    %v275 = vmax.f32 %v271, 0.0
    %v276 = vmax.f32 %v272, 0.0
    %v277 = vmax.f32 %v273, 0.0
    %v278 = vmax.f32 %v274, 0.0
    %v279 = vsub.f32 %v225, %v259
    %v280 = vsub.f32 %v228, %v260
    %v281 = vsub.f32 %v233, %v261
    %v282 = vsub.f32 %v236, %v262
    %v283 = vadd.f32 %v275, 1e-05
    %v284 = vadd.f32 %v276, 1e-05
    %v285 = vadd.f32 %v277, 1e-05
    %v286 = vadd.f32 %v278, 1e-05
    %v287 = vrsqrt.pop %v283
    %v288 = vrsqrt.pop %v284
    %v289 = vrsqrt.pop %v285
    %v290 = vrsqrt.pop %v286
    %v291 = vmul.f32 %v279, %v287
    %v292 = vmul.f32 %v280, %v288
    %v293 = vmul.f32 %v281, %v289
    %v294 = vmul.f32 %v282, %v290
    %v295 = vld [vmem:[%s3] sm:$0x1]
    %v297 = vlaneseq
    %v298 = vshrl.u32 %v297, 7
    %v299 = vsub.s32 0, %v298
    %v300 = vrot.slane %v295, %v299
    %v302 = vmul.f32 %v291, %v300
    %v303 = vmul.f32 %v292, %v300
    %v304 = vmul.f32 %v293, %v300
    %v305 = vmul.f32 %v294, %v300
    %v306 = vld [vmem:[%s4] sm:$0x1]
    %v308 = vlaneseq
    %v309 = vshrl.u32 %v308, 7
    %v310 = vsub.s32 0, %v309
    %v311 = vrot.slane %v306, %v310
    %v313 = vadd.f32 %v302, %v311
    %v314 = vadd.f32 %v303, %v311
    %v315 = vadd.f32 %v304, %v311
    %v316 = vadd.f32 %v305, %v311
    %v317 = vpack.c.bf16 %v314, %v313
    %v318 = vpack.c.bf16 %v316, %v315
    %v321 = vunpack.c.l.b16 %v317
    %v322 = vunpack.c.h.b16 %v317
    %v323 = vunpack.c.l.b16 %v318
    %v324 = vunpack.c.h.b16 %v318
    %v325 = vpack.c.b16 %v321, %v321
    %v326 = vpack.c.b16 %v322, %v322
    %v327 = vpack.c.b16 %v323, %v323
    %v328 = vpack.c.b16 %v324, %v324
    %333 = vst [vmem:[#allocation7] sm:$0xf] %v325
    %334 = vst [vmem:[#allocation7 + $0x4] sm:$0xf] %v326
    %335 = vst [vmem:[#allocation7 + $0x8] sm:$0xf] %v327
    %336 = vst [vmem:[#allocation7 + $0xc] sm:$0xf] %v328
    // Predicated region
    $region30: #{tpu_custom_call.1} parent=1 // pred_check
      _
    $region31: #{tpu_custom_call.1} parent=1 // pred_check_branch
      %338 = sbr.rel (0) target = $region33
    $region32: #{tpu_custom_call.1} parent=1 // pred_region
      %s340 = ssub.s32 256, 256
      %341 = vsyncadd [#allocation4], %s340
      %s342 = sshll.u32 [#allocation7], 4
      %s343 = int_to_ptr.vmem [resolvable:$true] %s342
      %348 = dma.vmem_to_hbm [thread:$0]  %s343, 256, %s5, [#allocation4], 64, 64, 4
    $region33: #{tpu_custom_call.1} parent=1 // pred_fallthru
      _
    // Predicated region
    $region34: #{tpu_custom_call.1} parent=1 // pred_check
      _
    $region35: #{tpu_custom_call.1} parent=1 // pred_check_branch
      %350 = sbr.rel (0) target = $region37
    $region36: #{tpu_custom_call.1} parent=1 // pred_region
      %351 = dma.done [#allocation4], 256
    $region37: #{tpu_custom_call.1} parent=1 // pred_fallthru
      _
    %352 = vsyncpa [#allocation3], 1
    %353 = vsyncpa [#allocation6], 1
    %354 = vsyncpa [#allocation4], 1

</llo_original>
